<compile_context>
chip_gen: v5e
topology: v5e:2x2
jax: 0.10.0
libtpu: 0.0.40
codegen_flags: <defaults>
</compile_context>

<pallas_src>
import jax
import jax.numpy as jnp
from jax.experimental import pallas as pl
from jax.experimental.pallas import tpu as pltpu

EPS = 1e-5                    # nn.BatchNorm2d default eps
_W_OFF = 8                    # sublane-aligned interior offset in the pad scratch
_VMEM_LIMIT = 32 * 1024 * 1024


# ----------------------------------------------------------------------------
# Kernel 1: per-channel batch statistics -> (scale, shift) for fused BN + ReLU.
# Grid over N (sequential reduction axis, "arbitrary"); partial sums accumulate
# in VMEM scratch and are finalized on the last grid step with pl.when.
# Training-mode BatchNorm: batch mean, biased variance, so
#   relu(bn(x)) == relu(x * scale + shift).
# ----------------------------------------------------------------------------
def _make_bn_stats_kernel(n, h, w):
    inv_cnt = 1.0 / float(n * h * w)

    def kernel(x_ref, gamma_ref, beta_ref, scale_ref, shift_ref, sum_ref, ssq_ref):
        b = pl.program_id(0)
        x = x_ref[0].astype(jnp.float32)                  # (H, W, C)
        xf = x.reshape(h * w, x.shape[-1])                # rows -> sublanes, C -> lanes
        psum = jnp.sum(xf, axis=0, keepdims=True)         # (1, C)
        pssq = jnp.sum(xf * xf, axis=0, keepdims=True)    # (1, C)

        @pl.when(b == 0)
        def _():
            sum_ref[...] = jnp.zeros(sum_ref.shape, sum_ref.dtype)
            ssq_ref[...] = jnp.zeros(ssq_ref.shape, ssq_ref.dtype)

        sum_ref[...] += psum
        ssq_ref[...] += pssq

        @pl.when(b == n - 1)
        def _():
            mean = sum_ref[...] * inv_cnt
            var = ssq_ref[...] * inv_cnt - mean * mean    # biased variance
            inv = jax.lax.rsqrt(var + EPS)
            g = gamma_ref[...]
            scale_ref[...] = g * inv
            shift_ref[...] = beta_ref[...] - mean * g * inv

    return kernel


def bn_scale_shift(x, gamma, beta):
    """Per-channel (scale, shift) of training-mode BatchNorm over NHWC input x."""
    n, h, w, c = x.shape
    kernel = _make_bn_stats_kernel(n, h, w)
    return pl.pallas_call(
        kernel,
        grid=(n,),
        in_specs=[
            pl.BlockSpec((1, h, w, c), lambda b: (b, 0, 0, 0)),
            pl.BlockSpec((1, c), lambda b: (0, 0)),
            pl.BlockSpec((1, c), lambda b: (0, 0)),
        ],
        out_specs=(
            pl.BlockSpec((1, c), lambda b: (0, 0)),
            pl.BlockSpec((1, c), lambda b: (0, 0)),
        ),
        out_shape=(
            jax.ShapeDtypeStruct((1, c), jnp.float32),
            jax.ShapeDtypeStruct((1, c), jnp.float32),
        ),
        scratch_shapes=[
            pltpu.VMEM((1, c), jnp.float32),
            pltpu.VMEM((1, c), jnp.float32),
        ],
        compiler_params=pltpu.CompilerParams(
            dimension_semantics=("arbitrary",),
            vmem_limit_bytes=_VMEM_LIMIT,
        ),
    )(x, gamma.reshape(1, c).astype(jnp.float32), beta.reshape(1, c).astype(jnp.float32))


# ----------------------------------------------------------------------------
# Kernel 2: fused  relu(x*scale + shift)  ->  Conv2d (no bias)  [+ residual],
# optionally also emitting the fused 1x1 shortcut conv of the same normalized
# activation tile.  Conv = kh*kw shifted-tap MXU matmuls over channels with
# bf16 operands and fp32 accumulation; padding built in VMEM scratch.
# Grid over N, marked "parallel".
# ----------------------------------------------------------------------------
def _make_fused_conv_kernel(kh, kw, stride, pad, h_out, w_out,
                            has_shortcut, has_residual, compute_dtype):
    def body(x_ref, scale_ref, shift_ref, w_ref, wsc_ref, r_ref,
             o_ref, sc_ref, pad_ref):
        x = x_ref[0].astype(jnp.float32)                          # (H, W, Cin)
        h, w, cin = x.shape
        cout = w_ref.shape[-1]

        # fused BN (precomputed scale/shift) + ReLU -- fp32 on the VPU
        scale = scale_ref[...].reshape(1, 1, cin)
        shift = shift_ref[...].reshape(1, 1, cin)
        y = jnp.maximum(x * scale + shift, 0.0)
        yb = y.astype(compute_dtype)                              # bf16 MXU operand

        # zero-padded activation tile in VMEM; interior stored at sublane-aligned
        # offset _W_OFF so the store is unmasked (no HBM jnp.pad copy needed).
        if pad > 0:
            pad_ref[...] = jnp.zeros(pad_ref.shape, pad_ref.dtype)
            pad_ref[pad:pad + h, _W_OFF:_W_OFF + w, :] = yb
            xp = pad_ref[...]
            w_base = _W_OFF - pad
        else:
            xp = yb
            w_base = 0

        # conv as kh*kw shifted-tap matmuls, fp32 accumulation on the MXU
        wv = w_ref[...]                                           # (kh*kw, Cin, Cout)
        acc = jnp.zeros((h_out * w_out, cout), jnp.float32)
        for dh in range(kh):
            for dw in range(kw):
                patch = xp[dh:dh + h_out * stride:stride,
                           w_base + dw:w_base + dw + w_out * stride:stride, :]
                acc = acc + jnp.dot(patch.reshape(h_out * w_out, cin),
                                    wv[dh * kw + dw],
                                    preferred_element_type=jnp.float32)

        if has_residual:                                          # fused residual add
            acc = acc + r_ref[...].astype(jnp.float32).reshape(h_out * w_out, cout)
        o_ref[...] = acc.reshape(1, h_out, w_out, cout).astype(o_ref.dtype)

        if has_shortcut:                                          # fused 1x1 shortcut conv
            sc_cout = sc_ref.shape[-1]
            ysc = yb[::stride, ::stride, :]
            sc = jnp.dot(ysc.reshape(h_out * w_out, cin),
                         wsc_ref[...].reshape(cin, sc_cout),
                         preferred_element_type=jnp.float32)
            sc_ref[...] = sc.reshape(1, h_out, w_out, sc_cout).astype(sc_ref.dtype)

    if has_shortcut:
        def kernel(x_ref, s_ref, b_ref, w_ref, wsc_ref, o_ref, sc_ref, pad_ref):
            body(x_ref, s_ref, b_ref, w_ref, wsc_ref, None, o_ref, sc_ref, pad_ref)
    elif has_residual:
        def kernel(x_ref, s_ref, b_ref, w_ref, r_ref, o_ref, pad_ref):
            body(x_ref, s_ref, b_ref, w_ref, None, r_ref, o_ref, None, pad_ref)
    else:
        def kernel(x_ref, s_ref, b_ref, w_ref, o_ref, pad_ref):
            body(x_ref, s_ref, b_ref, w_ref, None, None, o_ref, None, pad_ref)
    return kernel


def bn_relu_conv(x, scale, shift, w_hwio, *, stride=1, padding=1,
                 shortcut_w=None, residual=None, compute_dtype=jnp.bfloat16):
    """Fused relu(x*scale + shift) -> conv2d(w_hwio) [+ residual] (+ 1x1 shortcut)."""
    assert not (shortcut_w is not None and residual is not None)
    n, h, w, cin = x.shape
    kh, kw, _, cout = w_hwio.shape
    h_out = (h + 2 * padding - kh) // stride + 1
    w_out = (w + 2 * padding - kw) // stride + 1
    has_shortcut = shortcut_w is not None
    has_residual = residual is not None

    w_taps = w_hwio.reshape(kh * kw, cin, cout).astype(compute_dtype)

    in_specs = [
        pl.BlockSpec((1, h, w, cin), lambda b: (b, 0, 0, 0)),
        pl.BlockSpec((1, cin), lambda b: (0, 0)),
        pl.BlockSpec((1, cin), lambda b: (0, 0)),
        pl.BlockSpec((kh * kw, cin, cout), lambda b: (0, 0, 0)),
    ]
    args = [x, scale, shift, w_taps]
    out_shapes = [jax.ShapeDtypeStruct((n, h_out, w_out, cout), x.dtype)]
    out_specs = [pl.BlockSpec((1, h_out, w_out, cout), lambda b: (b, 0, 0, 0))]

    if has_shortcut:
        sc_cout = shortcut_w.shape[-1]
        in_specs.append(pl.BlockSpec((1, cin, sc_cout), lambda b: (0, 0, 0)))
        args.append(shortcut_w.reshape(1, cin, sc_cout).astype(compute_dtype))
        out_shapes.append(jax.ShapeDtypeStruct((n, h_out, w_out, sc_cout), x.dtype))
        out_specs.append(pl.BlockSpec((1, h_out, w_out, sc_cout), lambda b: (b, 0, 0, 0)))
    if has_residual:
        in_specs.append(pl.BlockSpec((1, h_out, w_out, cout), lambda b: (b, 0, 0, 0)))
        args.append(residual)

    kernel = _make_fused_conv_kernel(kh, kw, stride, padding, h_out, w_out,
                                     has_shortcut, has_residual, compute_dtype)
    pad_scratch = pltpu.VMEM((h + 2 * padding, _W_OFF + w + padding, cin), compute_dtype)

    multi = len(out_shapes) > 1
    return pl.pallas_call(
        kernel,
        grid=(n,),
        in_specs=in_specs,
        out_specs=tuple(out_specs) if multi else out_specs[0],
        out_shape=tuple(out_shapes) if multi else out_shapes[0],
        scratch_shapes=[pad_scratch],
        compiler_params=pltpu.CompilerParams(
            dimension_semantics=("parallel",),
            vmem_limit_bytes=_VMEM_LIMIT,
        ),
    )(*args)


# ----------------------------------------------------------------------------
# PreActBlock: parameter init + forward
# ----------------------------------------------------------------------------
def preact_block_init(key, in_planes, planes, stride=1, dtype=jnp.float32):
    k1, k2, k3 = jax.random.split(key, 3)
    params = {
        "bn1_gamma": jnp.ones((in_planes,), dtype),   # BatchNorm2d init: weight=1
        "bn1_beta": jnp.zeros((in_planes,), dtype),   #                   bias=0
        "conv1_w": jax.random.normal(k1, (3, 3, in_planes, planes), dtype)
                   * (2.0 / (in_planes * 9)) ** 0.5,
        "bn2_gamma": jnp.ones((planes,), dtype),
        "bn2_beta": jnp.zeros((planes,), dtype),
        "conv2_w": jax.random.normal(k2, (3, 3, planes, planes), dtype)
                   * (2.0 / (planes * 9)) ** 0.5,
    }
    if stride != 1 or in_planes != planes:            # expansion == 1
        params["shortcut_w"] = (jax.random.normal(k3, (1, 1, in_planes, planes), dtype)
                                * (2.0 / in_planes) ** 0.5)
    return params


def preact_block_forward(params, x_nchw, stride=1, compute_dtype=jnp.bfloat16):
    # PyTorch-facing interface: x is NCHW; all kernels run NHWC (C -> lanes).
    x = jnp.transpose(x_nchw, (0, 2, 3, 1))                          # NCHW -> NHWC

    # relu(bn1(x)) folded into conv1 (+ fused 1x1 shortcut conv sharing the tile)
    scale1, shift1 = bn_scale_shift(x, params["bn1_gamma"], params["bn1_beta"])
    if "shortcut_w" in params:
        out1, shortcut = bn_relu_conv(
            x, scale1, shift1, params["conv1_w"], stride=stride, padding=1,
            shortcut_w=params["shortcut_w"], compute_dtype=compute_dtype)
    else:
        out1 = bn_relu_conv(x, scale1, shift1, params["conv1_w"],
                            stride=stride, padding=1, compute_dtype=compute_dtype)
        shortcut = x                                                 # identity shortcut

    # relu(bn2(.)) folded into conv2, residual add fused in the epilogue
    scale2, shift2 = bn_scale_shift(out1, params["bn2_gamma"], params["bn2_beta"])
    out = bn_relu_conv(out1, scale2, shift2, params["conv2_w"],
                       stride=1, padding=1, residual=shortcut,
                       compute_dtype=compute_dtype)
    return jnp.transpose(out, (0, 3, 1, 2))                          # NHWC -> NCHW
    # TODO(synk): BatchNorm running_mean/running_var buffer updates (training-mode
    # side effect) are not modeled; they do not affect the forward output.


# ----------------------------------------------------------------------------
# Pure-JAX reference for validation (mirrors the kernel's bf16 MXU operand
# precision with fp32 accumulation so the comparison is tight).
# ----------------------------------------------------------------------------
def _reference(params, x_nchw, stride, compute_dtype=jnp.bfloat16):
    x = jnp.transpose(x_nchw, (0, 2, 3, 1)).astype(jnp.float32)

    def bn_relu_ref(v, g, b):
        mean = v.mean(axis=(0, 1, 2), keepdims=True)
        var = (v * v).mean(axis=(0, 1, 2), keepdims=True) - mean * mean
        return jax.nn.relu((v - mean) * jax.lax.rsqrt(var + EPS) * g + b)

    def conv_ref(v, w, s, p):
        return jax.lax.conv_general_dilated(
            v.astype(compute_dtype), w.astype(compute_dtype), (s, s),
            [(p, p), (p, p)], dimension_numbers=("NHWC", "HWIO", "NHWC"),
            preferred_element_type=jnp.float32)

    a1 = bn_relu_ref(x, params["bn1_gamma"], params["bn1_beta"])
    sc = (conv_ref(a1, params["shortcut_w"], stride, 0)
          if "shortcut_w" in params else x)
    o1 = conv_ref(a1, params["conv1_w"], stride, 1)
    a2 = bn_relu_ref(o1, params["bn2_gamma"], params["bn2_beta"])
    out = conv_ref(a2, params["conv2_w"], 1, 1) + sc
    return jnp.transpose(out, (0, 3, 1, 2))


if __name__ == "__main__":
    key = jax.random.PRNGKey(0)
    kx, kp = jax.random.split(key)

    # Small shapes implied by the module: batch=2, in_planes=4, planes=8,
    # spatial 16x16, stride=1 (in_planes != planes -> 1x1 shortcut conv path).
    in_planes, planes, stride = 4, 8, 1
    x = jax.random.normal(kx, (2, in_planes, 16, 16), jnp.float32)   # NCHW like PyTorch

    params = preact_block_init(kp, in_planes, planes, stride)
    y = preact_block_forward(params, x, stride=stride)
    jax.block_until_ready(y)

    assert y.shape == (2, planes, 16, 16), y.shape
    y_ref = _reference(params, x, stride)
    err = float(jnp.max(jnp.abs(y - y_ref)))
    assert err < 5e-2, f"mismatch vs reference: max abs err {err}"

    print("KERNEL_OK")
</pallas_src>

<mosaic_0001>
module attributes {stable_mosaic.version = 11 : i64} {
  func.func @kernel(%arg0: i32, %arg1: memref<1x16x16x4xf32, #tpu.memory_space<vmem>>, %arg2: memref<1x4xf32, #tpu.memory_space<vmem>>, %arg3: memref<1x4xf32, #tpu.memory_space<vmem>>, %arg4: memref<1x4xf32, #tpu.memory_space<vmem>>, %arg5: memref<1x4xf32, #tpu.memory_space<vmem>>, %arg6: memref<1x4xf32, #tpu.memory_space<vmem>>, %arg7: memref<1x4xf32, #tpu.memory_space<vmem>>) attributes {dimension_semantics = [#tpu.dimension_semantics<arbitrary>], iteration_bounds = array<i64: 2>, scalar_prefetch = 0 : i64, scratch_operands = 2 : i64, tpu.core_type = #tpu.core_type<tc>, window_params = [{transform_indices = @transform_0, window_bounds = array<i64: 1, 16, 16, 4>}, {pipeline_mode = #tpu.pipeline_mode<synchronous>, transform_indices = @transform_1, window_bounds = array<i64: 1, 4>}, {pipeline_mode = #tpu.pipeline_mode<synchronous>, transform_indices = @transform_2, window_bounds = array<i64: 1, 4>}, {pipeline_mode = #tpu.pipeline_mode<synchronous>, transform_indices = @transform_3, window_bounds = array<i64: 1, 4>}, {pipeline_mode = #tpu.pipeline_mode<synchronous>, transform_indices = @transform_4, window_bounds = array<i64: 1, 4>}]} {
    %c0 = arith.constant 0 : index
    %c0_0 = arith.constant 0 : index
    %c0_1 = arith.constant 0 : index
    %c0_2 = arith.constant 0 : index
    %0 = vector.load %arg1[%c0, %c0_0, %c0_1, %c0_2] : memref<1x16x16x4xf32, #tpu.memory_space<vmem>>, vector<1x16x16x4xf32>
    %1 = vector.shape_cast %0 : vector<1x16x16x4xf32> to vector<16x16x4xf32>
    %2 = vector.shape_cast %1 : vector<16x16x4xf32> to vector<256x4xf32>
    %cst = arith.constant dense<0.000000e+00> : vector<4xf32>
    %3 = vector.multi_reduction <add>, %2, %cst [0] : vector<256x4xf32> to vector<4xf32>
    %4 = vector.shape_cast %3 : vector<4xf32> to vector<1x4xf32>
    %5 = arith.mulf %2, %2 : vector<256x4xf32>
    %cst_3 = arith.constant dense<0.000000e+00> : vector<4xf32>
    %6 = vector.multi_reduction <add>, %5, %cst_3 [0] : vector<256x4xf32> to vector<4xf32>
    %7 = vector.shape_cast %6 : vector<4xf32> to vector<1x4xf32>
    %c0_i32 = arith.constant 0 : i32
    %8 = arith.cmpi eq, %arg0, %c0_i32 : i32
    %9 = arith.extui %8 : i1 to i32
    %c0_i32_4 = arith.constant 0 : i32
    %10 = arith.cmpi ne, %9, %c0_i32_4 : i32
    scf.if %10 {
      %cst_14 = arith.constant 0.000000e+00 : f32
      %20 = vector.broadcast %cst_14 : f32 to vector<1x4xf32>
      %c0_15 = arith.constant 0 : index
      %c0_16 = arith.constant 0 : index
      %21 = vector.load %arg6[%c0_15, %c0_16] : memref<1x4xf32, #tpu.memory_space<vmem>>, vector<1x4xf32>
      tpu.vector_store %arg6[%c0_15, %c0_16], %20 {strides = array<i32>} : memref<1x4xf32, #tpu.memory_space<vmem>>, vector<1x4xf32>,
      %cst_17 = arith.constant 0.000000e+00 : f32
      %22 = vector.broadcast %cst_17 : f32 to vector<1x4xf32>
      %c0_18 = arith.constant 0 : index
      %c0_19 = arith.constant 0 : index
      %23 = vector.load %arg7[%c0_18, %c0_19] : memref<1x4xf32, #tpu.memory_space<vmem>>, vector<1x4xf32>
      tpu.vector_store %arg7[%c0_18, %c0_19], %22 {strides = array<i32>} : memref<1x4xf32, #tpu.memory_space<vmem>>, vector<1x4xf32>,
    } else {
    }
    %c0_5 = arith.constant 0 : index
    %c0_6 = arith.constant 0 : index
    %11 = vector.load %arg6[%c0_5, %c0_6] : memref<1x4xf32, #tpu.memory_space<vmem>>, vector<1x4xf32>
    %12 = arith.addf %11, %4 : vector<1x4xf32>
    %c0_7 = arith.constant 0 : index
    %c0_8 = arith.constant 0 : index
    %13 = vector.load %arg6[%c0_7, %c0_8] : memref<1x4xf32, #tpu.memory_space<vmem>>, vector<1x4xf32>
    tpu.vector_store %arg6[%c0_7, %c0_8], %12 {strides = array<i32>} : memref<1x4xf32, #tpu.memory_space<vmem>>, vector<1x4xf32>,
    %c0_9 = arith.constant 0 : index
    %c0_10 = arith.constant 0 : index
    %14 = vector.load %arg7[%c0_9, %c0_10] : memref<1x4xf32, #tpu.memory_space<vmem>>, vector<1x4xf32>
    %15 = arith.addf %14, %7 : vector<1x4xf32>
    %c0_11 = arith.constant 0 : index
    %c0_12 = arith.constant 0 : index
    %16 = vector.load %arg7[%c0_11, %c0_12] : memref<1x4xf32, #tpu.memory_space<vmem>>, vector<1x4xf32>
    tpu.vector_store %arg7[%c0_11, %c0_12], %15 {strides = array<i32>} : memref<1x4xf32, #tpu.memory_space<vmem>>, vector<1x4xf32>,
    %c1_i32 = arith.constant 1 : i32
    %17 = arith.cmpi eq, %arg0, %c1_i32 : i32
    %18 = arith.extui %17 : i1 to i32
    %c0_i32_13 = arith.constant 0 : i32
    %19 = arith.cmpi ne, %18, %c0_i32_13 : i32
    scf.if %19 {
      %c0_14 = arith.constant 0 : index
      %c0_15 = arith.constant 0 : index
      %20 = vector.load %arg6[%c0_14, %c0_15] : memref<1x4xf32, #tpu.memory_space<vmem>>, vector<1x4xf32>
      %cst_16 = arith.constant 0.001953125 : f32
      %21 = vector.broadcast %cst_16 : f32 to vector<1x4xf32>
      %22 = arith.mulf %20, %21 : vector<1x4xf32>
      %c0_17 = arith.constant 0 : index
      %c0_18 = arith.constant 0 : index
      %23 = vector.load %arg7[%c0_17, %c0_18] : memref<1x4xf32, #tpu.memory_space<vmem>>, vector<1x4xf32>
      %cst_19 = arith.constant 0.001953125 : f32
      %24 = vector.broadcast %cst_19 : f32 to vector<1x4xf32>
      %25 = arith.mulf %23, %24 : vector<1x4xf32>
      %26 = arith.mulf %22, %22 : vector<1x4xf32>
      %27 = arith.subf %25, %26 : vector<1x4xf32>
      %cst_20 = arith.constant 9.99999974E-6 : f32
      %28 = vector.broadcast %cst_20 : f32 to vector<1x4xf32>
      %29 = arith.addf %27, %28 : vector<1x4xf32>
      %30 = math.rsqrt %29 : vector<1x4xf32>
      %c0_21 = arith.constant 0 : index
      %c0_22 = arith.constant 0 : index
      %31 = vector.load %arg2[%c0_21, %c0_22] : memref<1x4xf32, #tpu.memory_space<vmem>>, vector<1x4xf32>
      %32 = arith.mulf %31, %30 : vector<1x4xf32>
      %c0_23 = arith.constant 0 : index
      %c0_24 = arith.constant 0 : index
      %33 = vector.load %arg4[%c0_23, %c0_24] : memref<1x4xf32, #tpu.memory_space<vmem>>, vector<1x4xf32>
      tpu.vector_store %arg4[%c0_23, %c0_24], %32 {strides = array<i32>} : memref<1x4xf32, #tpu.memory_space<vmem>>, vector<1x4xf32>,
      %c0_25 = arith.constant 0 : index
      %c0_26 = arith.constant 0 : index
      %34 = vector.load %arg3[%c0_25, %c0_26] : memref<1x4xf32, #tpu.memory_space<vmem>>, vector<1x4xf32>
      %35 = arith.mulf %22, %31 : vector<1x4xf32>
      %36 = arith.mulf %35, %30 : vector<1x4xf32>
      %37 = arith.subf %34, %36 : vector<1x4xf32>
      %c0_27 = arith.constant 0 : index
      %c0_28 = arith.constant 0 : index
      %38 = vector.load %arg5[%c0_27, %c0_28] : memref<1x4xf32, #tpu.memory_space<vmem>>, vector<1x4xf32>
      tpu.vector_store %arg5[%c0_27, %c0_28], %37 {strides = array<i32>} : memref<1x4xf32, #tpu.memory_space<vmem>>, vector<1x4xf32>,
    } else {
    }
    return
  }
  func.func @transform_0(%arg0: i32) -> (i32, i32, i32, i32) {
    %c0_i32 = arith.constant 0 : i32
    %c0_i32_0 = arith.constant 0 : i32
    %c0_i32_1 = arith.constant 0 : i32
    %c0_i32_2 = arith.constant 0 : i32
    return %arg0, %c0_i32, %c0_i32_0, %c0_i32_1 : i32, i32, i32, i32
  }
  func.func @transform_1(%arg0: i32) -> (i32, i32) {
    %c0_i32 = arith.constant 0 : i32
    %c0_i32_0 = arith.constant 0 : i32
    %c0_i32_1 = arith.constant 0 : i32
    return %c0_i32, %c0_i32_0 : i32, i32
  }
  func.func @transform_2(%arg0: i32) -> (i32, i32) {
    %c0_i32 = arith.constant 0 : i32
    %c0_i32_0 = arith.constant 0 : i32
    %c0_i32_1 = arith.constant 0 : i32
    return %c0_i32, %c0_i32_0 : i32, i32
  }
  func.func @transform_3(%arg0: i32) -> (i32, i32) {
    %c0_i32 = arith.constant 0 : i32
    %c0_i32_0 = arith.constant 0 : i32
    %c0_i32_1 = arith.constant 0 : i32
    return %c0_i32, %c0_i32_0 : i32, i32
  }
  func.func @transform_4(%arg0: i32) -> (i32, i32) {
    %c0_i32 = arith.constant 0 : i32
    %c0_i32_0 = arith.constant 0 : i32
    %c0_i32_1 = arith.constant 0 : i32
    return %c0_i32, %c0_i32_0 : i32, i32
  }
}

</mosaic_0001>

<llo_original>
// kernel: tpu_custom_call.1
$region0: #{tpu_custom_call.1}
  #allocation0 [shape = 'u32[]', space=smem, size = 0x4, offset = 0x4, fixed_abs, tag = 'smem constant byte address 0x4 - core index']
  #allocation1 [shape = 'u32[72,128]{1,0:T(1,128)}', space=vmem, size = 0x9000, scoped, tag = 'internal scratch']
  #allocation2 [shape = 'f32[1,4]{1,0:T(1,128)}', space=vmem, size = 0x200, scoped, tag = 'scratch operand']
  #allocation3 [shape = 'f32[1,4]{1,0:T(1,128)}', space=vmem, size = 0x200, scoped, tag = 'scratch operand']
  %s0 = inlined_call_operand.vmem [shape: f32[2,16,16,4], index: 0, kind: input, shape index: {}]
  %s1 = inlined_call_operand.vmem [shape: f32[1,4], index: 1, kind: input, shape index: {}]
  %s2 = inlined_call_operand.vmem [shape: f32[1,4], index: 2, kind: input, shape index: {}]
  %s3 = inlined_call_operand.hbm [shape: f32[1,4], index: 3, kind: output, shape index: {0}]
  %s4 = inlined_call_operand.hbm [shape: f32[1,4], index: 4, kind: output, shape index: {1}]
  %5 = xla_tuple %s3, %s4
  %s6 = sld [smem:[#allocation0]]
  $region61: #{tpu_custom_call.1} parent=0
    _
  %s8 = ssub.s32 1, %s6
  %s9 = scalar_select 0, %s8, %s6
  $region1: #{tpu_custom_call.1} parent=0
    #allocation4 [shape = 'u8[512]{0}', space=vmem, size = 0x400, scoped, tag = 'output window, operand 0, single buffered']
    #allocation5 [shape = 's32[2]{0}', space=sflag, size = 0x8, scoped, tag = 'scoped memory for tpu_custom_call.1']
    #allocation6 [shape = 'u8[512]{0}', space=vmem, size = 0x400, scoped, tag = 'output window, operand 1, single buffered']
    #allocation7 [shape = 's32[1]{0}', space=sflag, size = 0x4, scoped, tag = 'scoped memory for tpu_custom_call.1']
    %10 = vsyncpa [#allocation5], 0
    %11 = vsyncpa [#allocation7], 0
    loop: start=0, step=1, limit=4
    $region2: #{tpu_custom_call.1} parent=1 // loop_pre_header
      _
    $region3: #{tpu_custom_call.1} parent=1 // loop_header
      %s13 = sphi 0, %s17
      %p14 = scmp.ge.s32.totalorder %s13, 4
      %s23 = sphi 0, %s25
      %s26 = sphi 0, %s23
      %s27 = sphi 0, %s26
      %s43 = sphi 0, %s27
      %s47 = sphi 0, %s47
      %s49 = sphi 0, %s47
      %s50 = sphi 0, %s49
      %s64 = sphi 0, %s50
      %s68 = sphi 0, %s68
      %s70 = sphi 0, %s68
      %s71 = sphi 0, %s70
      %s85 = sphi 0, %s71
      %s89 = sphi 0, %s89
      %s91 = sphi 0, %s89
      %s92 = sphi 0, %s91
      %s106 = sphi 0, %s92
      %s110 = sphi 0, %s110
      %s112 = sphi 0, %s110
      %s113 = sphi 0, %s112
      %s127 = sphi 0, %s113
    $region4: #{tpu_custom_call.1} parent=1 // loop_header_branch
      %16 = sbr.rel (%p14) target = $region8
    $region5: #{tpu_custom_call.1} parent=1 // loop_body
      %s18 = ssub.s32 %s13, 1
      %s19 = ssub.s32 %s13, 2
      %s20 = sadd.s32 %s13, 1
      %s21 = ssub.s32 %s13, %s20
      %p22 = scmp.eq.s32.totalorder %s21, 0
      %s24 = sadd.s32 %s23, 1
      %s25 = scalar_select %p22, %s23, %s24
      %p28 = pneg %p22
      %p29 = scmp.eq.s32.totalorder %s13, 1
      %p30 = por %p28, %p29
      %p31 = scmp.ne.s32.totalorder %s23, %s26
      %p32 = scmp.eq.s32.totalorder %s13, 0
      %p33 = por %p31, %p32
      %p34 = scmp.ne.s32.totalorder %s23, %s26
      %p35 = scmp.eq.s32.totalorder %s18, 1
      %p36 = por %p34, %p35
      %p37 = scmp.ne.s32.totalorder %s26, %s27
      %p38 = scmp.eq.s32.totalorder %s18, 0
      %p39 = por %p37, %p38
      %p40 = scmp.ne.s32.totalorder %s26, %s27
      %p41 = scmp.eq.s32.totalorder %s19, 1
      %p42 = por %p40, %p41
      %p44 = scmp.ne.s32.totalorder %s27, %s43
      %p45 = scmp.eq.s32.totalorder %s19, 0
      %p46 = por %p44, %p45
      %s48 = sadd.s32 %s47, 1
      %p51 = scmp.eq.s32.totalorder %s13, 1
      %p52 = scmp.ne.s32.totalorder %s47, %s49
      %p53 = scmp.eq.s32.totalorder %s13, 0
      %p54 = por %p52, %p53
      %p55 = scmp.ne.s32.totalorder %s47, %s49
      %p56 = scmp.eq.s32.totalorder %s18, 1
      %p57 = por %p55, %p56
      %p58 = scmp.ne.s32.totalorder %s49, %s50
      %p59 = scmp.eq.s32.totalorder %s18, 0
      %p60 = por %p58, %p59
      %p61 = scmp.ne.s32.totalorder %s49, %s50
      %p62 = scmp.eq.s32.totalorder %s19, 1
      %p63 = por %p61, %p62
      %p65 = scmp.ne.s32.totalorder %s50, %s64
      %p66 = scmp.eq.s32.totalorder %s19, 0
      %p67 = por %p65, %p66
      %s69 = sadd.s32 %s68, 1
      %p72 = scmp.eq.s32.totalorder %s13, 1
      %p73 = scmp.ne.s32.totalorder %s68, %s70
      %p74 = scmp.eq.s32.totalorder %s13, 0
      %p75 = por %p73, %p74
      %p76 = scmp.ne.s32.totalorder %s68, %s70
      %p77 = scmp.eq.s32.totalorder %s18, 1
      %p78 = por %p76, %p77
      %p79 = scmp.ne.s32.totalorder %s70, %s71
      %p80 = scmp.eq.s32.totalorder %s18, 0
      %p81 = por %p79, %p80
      %p82 = scmp.ne.s32.totalorder %s70, %s71
      %p83 = scmp.eq.s32.totalorder %s19, 1
      %p84 = por %p82, %p83
      %p86 = scmp.ne.s32.totalorder %s71, %s85
      %p87 = scmp.eq.s32.totalorder %s19, 0
      %p88 = por %p86, %p87
      %s90 = sadd.s32 %s89, 1
      %p93 = scmp.eq.s32.totalorder %s13, 1
      %p94 = scmp.ne.s32.totalorder %s89, %s91
      %p95 = scmp.eq.s32.totalorder %s13, 0
      %p96 = por %p94, %p95
      %p97 = scmp.ne.s32.totalorder %s89, %s91
      %p98 = scmp.eq.s32.totalorder %s18, 1
      %p99 = por %p97, %p98
      %p100 = scmp.ne.s32.totalorder %s91, %s92
      %p101 = scmp.eq.s32.totalorder %s18, 0
      %p102 = por %p100, %p101
      %p103 = scmp.ne.s32.totalorder %s91, %s92
      %p104 = scmp.eq.s32.totalorder %s19, 1
      %p105 = por %p103, %p104
      %p107 = scmp.ne.s32.totalorder %s92, %s106
      %p108 = scmp.eq.s32.totalorder %s19, 0
      %p109 = por %p107, %p108
      %s111 = sadd.s32 %s110, 1
      %p114 = scmp.eq.s32.totalorder %s13, 1
      %p115 = scmp.ne.s32.totalorder %s110, %s112
      %p116 = scmp.eq.s32.totalorder %s13, 0
      %p117 = por %p115, %p116
      %p118 = scmp.ne.s32.totalorder %s110, %s112
      %p119 = scmp.eq.s32.totalorder %s18, 1
      %p120 = por %p118, %p119
      %p121 = scmp.ne.s32.totalorder %s112, %s113
      %p122 = scmp.eq.s32.totalorder %s18, 0
      %p123 = por %p121, %p122
      %p124 = scmp.ne.s32.totalorder %s112, %s113
      %p125 = scmp.eq.s32.totalorder %s19, 1
      %p126 = por %p124, %p125
      %p128 = scmp.ne.s32.totalorder %s113, %s127
      %p129 = scmp.eq.s32.totalorder %s19, 0
      %p130 = por %p128, %p129
      %p131 = scmp.le.s32.totalorder 1, %s13
      %p132 = scmp.lt.s32.totalorder %s13, 3
      %p133 = pnand %p131, %p132
      %p134 = pneg %p133
      // Predicated region
      $region9: #{tpu_custom_call.1} parent=5 // pred_check
        _
      $region10: #{tpu_custom_call.1} parent=5 // pred_check_branch
        %136 = sbr.rel (%p133) target = $region12
      $region11: #{tpu_custom_call.1} parent=5 // pred_region
        %s137 = ssub.s32 %s13, 1
        // Predicated region
        $region13: #{tpu_custom_call.1} parent=11 // pred_check
          %p138 = pneg %p60
        $region14: #{tpu_custom_call.1} parent=11 // pred_check_branch
          %140 = sbr.rel (%p138) target = $region16
        $region15: #{tpu_custom_call.1} parent=11 // pred_region
          _
        $region16: #{tpu_custom_call.1} parent=11 // pred_fallthru
          _
        // Predicated region
        $region17: #{tpu_custom_call.1} parent=11 // pred_check
          %p141 = pneg %p81
        $region18: #{tpu_custom_call.1} parent=11 // pred_check_branch
          %143 = sbr.rel (%p141) target = $region20
        $region19: #{tpu_custom_call.1} parent=11 // pred_region
          _
        $region20: #{tpu_custom_call.1} parent=11 // pred_fallthru
          _
      $region12: #{tpu_custom_call.1} parent=5 // pred_fallthru
        _
      %p144 = scmp.lt.s32.totalorder %s13, 2
      // Predicated region
      $region21: #{tpu_custom_call.1} parent=5 // pred_check
        %p145 = pneg %p144
      $region22: #{tpu_custom_call.1} parent=5 // pred_check_branch
        %147 = sbr.rel (%p145) target = $region24
      $region23: #{tpu_custom_call.1} parent=5 // pred_region
        // Predicated region
        $region25: #{tpu_custom_call.1} parent=23 // pred_check
          %p148 = pneg %p33
        $region26: #{tpu_custom_call.1} parent=23 // pred_check_branch
          %150 = sbr.rel (%p148) target = $region28
        $region27: #{tpu_custom_call.1} parent=23 // pred_region
          %p151 = scmp.lt.s32.totalorder %s13, 1
          %s152 = scalar_select %p151, %s13, 1
          %s153 = smul.addr %s152, 32
          %s154 = smul.addr %s153, 8
          %s155 = scalar_lea.vmem %s0, %s154
        $region28: #{tpu_custom_call.1} parent=23 // pred_fallthru
          _
      $region24: #{tpu_custom_call.1} parent=5 // pred_fallthru
        _
      %p156 = scmp.le.s32.totalorder 1, %s13
      %p157 = scmp.lt.s32.totalorder %s13, 3
      %p158 = pnand %p156, %p157
      %p159 = pneg %p158
      // Predicated region
      $region29: #{tpu_custom_call.1} parent=5 // pred_check
        _
      $region30: #{tpu_custom_call.1} parent=5 // pred_check_branch
        %161 = sbr.rel (%p158) target = $region32
      $region31: #{tpu_custom_call.1} parent=5 // pred_region
        %s162 = ssub.s32 %s13, 1
        %p163 = scmp.lt.s32.totalorder %s18, 1
        %s164 = scalar_select %p163, %s18, 1
        %s165 = smul.addr %s164, 32
        %s166 = smul.addr %s165, 8
        %s167 = scalar_lea.vmem %s0, %s166
        %p168 = pneg %p39
        %p169 = pneg %p36
        %p170 = pneg %p60
        %p171 = pneg %p57
        %p172 = pneg %p81
        %p173 = pneg %p78
        %p174 = pneg %p102
        %p175 = pneg %p99
        %p176 = pneg %p123
        %p177 = pneg %p120
        %p178 = scmp.lt.s32.totalorder %s18, 1
        %s179 = scalar_select %p178, %s18, 1
        %s180 = smul.addr %s179, 32
        %s181 = smul.addr %s180, 8
        %s182 = scalar_lea.vmem %s0, %s181
        %v183 = vld [vmem:[%s182] sm:$0xff]
        %v184 = vld [vmem:[%s182 + $0x8] sm:$0xff]
        %v185 = vld [vmem:[%s182 + $0x10] sm:$0xff]
        %v186 = vld [vmem:[%s182 + $0x18] sm:$0xff]
        %v187 = vld [vmem:[%s182 + $0x20] sm:$0xff]
        %v188 = vld [vmem:[%s182 + $0x28] sm:$0xff]
        %v189 = vld [vmem:[%s182 + $0x30] sm:$0xff]
        %v190 = vld [vmem:[%s182 + $0x38] sm:$0xff]
        %v191 = vld [vmem:[%s182 + $0x40] sm:$0xff]
        %v192 = vld [vmem:[%s182 + $0x48] sm:$0xff]
        %v193 = vld [vmem:[%s182 + $0x50] sm:$0xff]
        %v194 = vld [vmem:[%s182 + $0x58] sm:$0xff]
        %v195 = vld [vmem:[%s182 + $0x60] sm:$0xff]
        %v196 = vld [vmem:[%s182 + $0x68] sm:$0xff]
        %v197 = vld [vmem:[%s182 + $0x70] sm:$0xff]
        %v198 = vld [vmem:[%s182 + $0x78] sm:$0xff]
        %v199 = vld [vmem:[%s182 + $0x80] sm:$0xff]
        %v200 = vld [vmem:[%s182 + $0x88] sm:$0xff]
        %v201 = vld [vmem:[%s182 + $0x90] sm:$0xff]
        %v202 = vld [vmem:[%s182 + $0x98] sm:$0xff]
        %v203 = vld [vmem:[%s182 + $0xa0] sm:$0xff]
        %v204 = vld [vmem:[%s182 + $0xa8] sm:$0xff]
        %v205 = vld [vmem:[%s182 + $0xb0] sm:$0xff]
        %v206 = vld [vmem:[%s182 + $0xb8] sm:$0xff]
        %v207 = vld [vmem:[%s182 + $0xc0] sm:$0xff]
        %v208 = vld [vmem:[%s182 + $0xc8] sm:$0xff]
        %v209 = vld [vmem:[%s182 + $0xd0] sm:$0xff]
        %v210 = vld [vmem:[%s182 + $0xd8] sm:$0xff]
        %v211 = vld [vmem:[%s182 + $0xe0] sm:$0xff]
        %v212 = vld [vmem:[%s182 + $0xe8] sm:$0xff]
        %v213 = vld [vmem:[%s182 + $0xf0] sm:$0xff]
        %v214 = vld [vmem:[%s182 + $0xf8] sm:$0xff]
        %vm215 = vcmask 31744
        %v216 = vsel %vm215, %v183, 0.0
        %v217 = vsel %vm215, %v184, 0.0
        %v218 = vadd.f32 %v216, %v217
        %v219 = vsel %vm215, %v185, 0.0
        %v220 = vadd.f32 %v218, %v219
        %v221 = vsel %vm215, %v186, 0.0
        %v222 = vadd.f32 %v220, %v221
        %v223 = vsel %vm215, %v187, 0.0
        %v224 = vadd.f32 %v222, %v223
        %v225 = vsel %vm215, %v188, 0.0
        %v226 = vadd.f32 %v224, %v225
        %v227 = vsel %vm215, %v189, 0.0
        %v228 = vadd.f32 %v226, %v227
        %v229 = vsel %vm215, %v190, 0.0
        %v230 = vadd.f32 %v228, %v229
        %v231 = vsel %vm215, %v191, 0.0
        %v232 = vadd.f32 %v230, %v231
        %v233 = vsel %vm215, %v192, 0.0
        %v234 = vadd.f32 %v232, %v233
        %v235 = vsel %vm215, %v193, 0.0
        %v236 = vadd.f32 %v234, %v235
        %v237 = vsel %vm215, %v194, 0.0
        %v238 = vadd.f32 %v236, %v237
        %v239 = vsel %vm215, %v195, 0.0
        %v240 = vadd.f32 %v238, %v239
        %v241 = vsel %vm215, %v196, 0.0
        %v242 = vadd.f32 %v240, %v241
        %v243 = vsel %vm215, %v197, 0.0
        %v244 = vadd.f32 %v242, %v243
        %v245 = vsel %vm215, %v198, 0.0
        %v246 = vadd.f32 %v244, %v245
        %v247 = vsel %vm215, %v199, 0.0
        %v248 = vadd.f32 %v246, %v247
        %v249 = vsel %vm215, %v200, 0.0
        %v250 = vadd.f32 %v248, %v249
        %v251 = vsel %vm215, %v201, 0.0
        %v252 = vadd.f32 %v250, %v251
        %v253 = vsel %vm215, %v202, 0.0
        %v254 = vadd.f32 %v252, %v253
        %v255 = vsel %vm215, %v203, 0.0
        %v256 = vadd.f32 %v254, %v255
        %v257 = vsel %vm215, %v204, 0.0
        %v258 = vadd.f32 %v256, %v257
        %v259 = vsel %vm215, %v205, 0.0
        %v260 = vadd.f32 %v258, %v259
        %v261 = vsel %vm215, %v206, 0.0
        %v262 = vadd.f32 %v260, %v261
        %v263 = vsel %vm215, %v207, 0.0
        %v264 = vadd.f32 %v262, %v263
        %v265 = vsel %vm215, %v208, 0.0
        %v266 = vadd.f32 %v264, %v265
        %v267 = vsel %vm215, %v209, 0.0
        %v268 = vadd.f32 %v266, %v267
        %v269 = vsel %vm215, %v210, 0.0
        %v270 = vadd.f32 %v268, %v269
        %v271 = vsel %vm215, %v211, 0.0
        %v272 = vadd.f32 %v270, %v271
        %v273 = vsel %vm215, %v212, 0.0
        %v274 = vadd.f32 %v272, %v273
        %v275 = vsel %vm215, %v213, 0.0
        %v276 = vadd.f32 %v274, %v275
        %v277 = vsel %vm215, %v214, 0.0
        %v278 = vadd.f32 %v276, %v277
        %v279 = vrot.slane %v278, 4
        %v280 = vadd.f32 %v278, %v279
        %v281 = vrot.slane %v280, 2
        %v282 = vadd.f32 %v280, %v281
        %v283 = vrot.slane %v282, 1
        %v284 = vadd.f32 %v282, %v283
        %v285 = vmul.f32 %v183, %v183
        %v286 = vmul.f32 %v184, %v184
        %v287 = vmul.f32 %v185, %v185
        %v288 = vmul.f32 %v186, %v186
        %v289 = vmul.f32 %v187, %v187
        %v290 = vmul.f32 %v188, %v188
        %v291 = vmul.f32 %v189, %v189
        %v292 = vmul.f32 %v190, %v190
        %v293 = vmul.f32 %v191, %v191
        %v294 = vmul.f32 %v192, %v192
        %v295 = vmul.f32 %v193, %v193
        %v296 = vmul.f32 %v194, %v194
        %v297 = vmul.f32 %v195, %v195
        %v298 = vmul.f32 %v196, %v196
        %v299 = vmul.f32 %v197, %v197
        %v300 = vmul.f32 %v198, %v198
        %v301 = vmul.f32 %v199, %v199
        %v302 = vmul.f32 %v200, %v200
        %v303 = vmul.f32 %v201, %v201
        %v304 = vmul.f32 %v202, %v202
        %v305 = vmul.f32 %v203, %v203
        %v306 = vmul.f32 %v204, %v204
        %v307 = vmul.f32 %v205, %v205
        %v308 = vmul.f32 %v206, %v206
        %v309 = vmul.f32 %v207, %v207
        %v310 = vmul.f32 %v208, %v208
        %v311 = vmul.f32 %v209, %v209
        %v312 = vmul.f32 %v210, %v210
        %v313 = vmul.f32 %v211, %v211
        %v314 = vmul.f32 %v212, %v212
        %v315 = vmul.f32 %v213, %v213
        %v316 = vmul.f32 %v214, %v214
        %v317 = vsel %vm215, %v285, 0.0
        %v318 = vsel %vm215, %v286, 0.0
        %v319 = vadd.f32 %v317, %v318
        %v320 = vsel %vm215, %v287, 0.0
        %v321 = vadd.f32 %v319, %v320
        %v322 = vsel %vm215, %v288, 0.0
        %v323 = vadd.f32 %v321, %v322
        %v324 = vsel %vm215, %v289, 0.0
        %v325 = vadd.f32 %v323, %v324
        %v326 = vsel %vm215, %v290, 0.0
        %v327 = vadd.f32 %v325, %v326
        %v328 = vsel %vm215, %v291, 0.0
        %v329 = vadd.f32 %v327, %v328
        %v330 = vsel %vm215, %v292, 0.0
        %v331 = vadd.f32 %v329, %v330
        %v332 = vsel %vm215, %v293, 0.0
        %v333 = vadd.f32 %v331, %v332
        %v334 = vsel %vm215, %v294, 0.0
        %v335 = vadd.f32 %v333, %v334
        %v336 = vsel %vm215, %v295, 0.0
        %v337 = vadd.f32 %v335, %v336
        %v338 = vsel %vm215, %v296, 0.0
        %v339 = vadd.f32 %v337, %v338
        %v340 = vsel %vm215, %v297, 0.0
        %v341 = vadd.f32 %v339, %v340
        %v342 = vsel %vm215, %v298, 0.0
        %v343 = vadd.f32 %v341, %v342
        %v344 = vsel %vm215, %v299, 0.0
        %v345 = vadd.f32 %v343, %v344
        %v346 = vsel %vm215, %v300, 0.0
        %v347 = vadd.f32 %v345, %v346
        %v348 = vsel %vm215, %v301, 0.0
        %v349 = vadd.f32 %v347, %v348
        %v350 = vsel %vm215, %v302, 0.0
        %v351 = vadd.f32 %v349, %v350
        %v352 = vsel %vm215, %v303, 0.0
        %v353 = vadd.f32 %v351, %v352
        %v354 = vsel %vm215, %v304, 0.0
        %v355 = vadd.f32 %v353, %v354
        %v356 = vsel %vm215, %v305, 0.0
        %v357 = vadd.f32 %v355, %v356
        %v358 = vsel %vm215, %v306, 0.0
        %v359 = vadd.f32 %v357, %v358
        %v360 = vsel %vm215, %v307, 0.0
        %v361 = vadd.f32 %v359, %v360
        %v362 = vsel %vm215, %v308, 0.0
        %v363 = vadd.f32 %v361, %v362
        %v364 = vsel %vm215, %v309, 0.0
        %v365 = vadd.f32 %v363, %v364
        %v366 = vsel %vm215, %v310, 0.0
        %v367 = vadd.f32 %v365, %v366
        %v368 = vsel %vm215, %v311, 0.0
        %v369 = vadd.f32 %v367, %v368
        %v370 = vsel %vm215, %v312, 0.0
        %v371 = vadd.f32 %v369, %v370
        %v372 = vsel %vm215, %v313, 0.0
        %v373 = vadd.f32 %v371, %v372
        %v374 = vsel %vm215, %v314, 0.0
        %v375 = vadd.f32 %v373, %v374
        %v376 = vsel %vm215, %v315, 0.0
        %v377 = vadd.f32 %v375, %v376
        %v378 = vsel %vm215, %v316, 0.0
        %v379 = vadd.f32 %v377, %v378
        %v380 = vrot.slane %v379, 4
        %v381 = vadd.f32 %v379, %v380
        %v382 = vrot.slane %v381, 2
        %v383 = vadd.f32 %v381, %v382
        %v384 = vrot.slane %v383, 1
        %v385 = vadd.f32 %v383, %v384
        %p386 = scmp.eq.s32.totalorder %s18, 0
        // Predicated region
        $region33: #{tpu_custom_call.1} parent=31 // pred_check
          %p387 = pneg %p386
        $region34: #{tpu_custom_call.1} parent=31 // pred_check_branch
          %389 = sbr.rel (%p387) target = $region36
        $region35: #{tpu_custom_call.1} parent=31 // pred_region
          %vm390 = vcmask 24576
          %391 = vst.msk [vmem:[#allocation2] sm:$0x1] %vm390, 0.0
          %392 = vst.msk [vmem:[#allocation3] sm:$0x1] %vm390, 0.0
        $region36: #{tpu_custom_call.1} parent=31 // pred_fallthru
          _
        %v393 = vld [vmem:[#allocation2] sm:$0x1]
        %v394 = vadd.f32 %v393, %v284
        %vm395 = vcmask 24576
        %396 = vst.msk [vmem:[#allocation2] sm:$0x1] %vm395, %v394
        %v397 = vld [vmem:[#allocation3] sm:$0x1]
        %v398 = vadd.f32 %v397, %v385
        %399 = vst.msk [vmem:[#allocation3] sm:$0x1] %vm395, %v398
        %p400 = scmp.eq.s32.totalorder %s18, 1
        // Predicated region
        $region37: #{tpu_custom_call.1} parent=31 // pred_check
          %p401 = pneg %p400
        $region38: #{tpu_custom_call.1} parent=31 // pred_check_branch
          %403 = sbr.rel (%p401) target = $region40
        $region39: #{tpu_custom_call.1} parent=31 // pred_region
          %v404 = vld [vmem:[#allocation2] sm:$0x1]
          %v405 = vmul.f32 %v404, 0.001953125
          %v406 = vld [vmem:[#allocation3] sm:$0x1]
          %v407 = vmul.f32 %v406, 0.001953125
          %v408 = vmul.f32 %v405, %v405
          %v409 = vsub.f32 %v407, %v408
          %v410 = vadd.f32 %v409, 1e-05
          %v411 = vrsqrt.pop %v410
          %v412 = vmul.f32 %v411, %v410
          %v413 = vmul.f32 %v412, %v411
          %v414 = vmul.f32 0.5, %v413
          %v415 = vsub.f32 1.5, %v414
          %v416 = vmul.f32 %v411, %v415
          %vm417 = vweird.f32 %v410
          %vm418 = vweird.f32 %v411
          %vm419 = vmor %vm417, %vm418
          %v420 = vsel %vm419, %v411, %v416
          %v421 = vld [vmem:[%s1] sm:$0x1]
          %v422 = vmul.f32 %v421, %v420
          %423 = vst.msk [vmem:[#allocation4] sm:$0x1] %vm395, %v422
          %v424 = vld [vmem:[%s2] sm:$0x1]
          %v425 = vmul.f32 %v405, %v421
          %v426 = vmul.f32 %v425, %v420
          %v427 = vsub.f32 %v424, %v426
          %428 = vst.msk [vmem:[#allocation6] sm:$0x1] %vm395, %v427
        $region40: #{tpu_custom_call.1} parent=31 // pred_fallthru
          _
        // Predicated region
        $region41: #{tpu_custom_call.1} parent=31 // pred_check
          %p429 = pneg %p99
        $region42: #{tpu_custom_call.1} parent=31 // pred_check_branch
          %431 = sbr.rel (%p429) target = $region44
        $region43: #{tpu_custom_call.1} parent=31 // pred_region
          %433 = vsyncadd [#allocation5], 0
          %s435 = sshll.u32 [#allocation4], 4
          %s436 = int_to_ptr.vmem [resolvable:$true] %s435
          %s437 = sshll.u32 %s3, 4
          %s438 = int_to_ptr.hbm [resolvable:$true] %s437
          %440 = dma.vmem_to_hbm [thread:$0]  %s436, 16, %s438, [#allocation5]
        $region44: #{tpu_custom_call.1} parent=31 // pred_fallthru
          _
        // Predicated region
        $region45: #{tpu_custom_call.1} parent=31 // pred_check
          %p441 = pneg %p120
        $region46: #{tpu_custom_call.1} parent=31 // pred_check_branch
          %443 = sbr.rel (%p441) target = $region48
        $region47: #{tpu_custom_call.1} parent=31 // pred_region
          %445 = vsyncadd [#allocation7], 0
          %s447 = sshll.u32 [#allocation6], 4
          %s448 = int_to_ptr.vmem [resolvable:$true] %s447
          %s449 = sshll.u32 %s4, 4
          %s450 = int_to_ptr.hbm [resolvable:$true] %s449
          %452 = dma.vmem_to_hbm [thread:$0]  %s448, 16, %s450, [#allocation7]
        $region48: #{tpu_custom_call.1} parent=31 // pred_fallthru
          _
        // Predicated region
        $region49: #{tpu_custom_call.1} parent=31 // pred_check
          %p453 = pneg %p99
        $region50: #{tpu_custom_call.1} parent=31 // pred_check_branch
          %455 = sbr.rel (%p453) target = $region52
        $region51: #{tpu_custom_call.1} parent=31 // pred_region
          %457 = dma.done [#allocation5], 16
        $region52: #{tpu_custom_call.1} parent=31 // pred_fallthru
          _
        // Predicated region
        $region53: #{tpu_custom_call.1} parent=31 // pred_check
          %p458 = pneg %p120
        $region54: #{tpu_custom_call.1} parent=31 // pred_check_branch
          %460 = sbr.rel (%p458) target = $region56
        $region55: #{tpu_custom_call.1} parent=31 // pred_region
          %462 = dma.done [#allocation7], 16
        $region56: #{tpu_custom_call.1} parent=31 // pred_fallthru
          _
      $region32: #{tpu_custom_call.1} parent=5 // pred_fallthru
        _
      %p463 = scmp.le.s32.totalorder 2, %s13
      // Predicated region
      $region57: #{tpu_custom_call.1} parent=5 // pred_check
        %p464 = pneg %p463
      $region58: #{tpu_custom_call.1} parent=5 // pred_check_branch
        %466 = sbr.rel (%p464) target = $region60
      $region59: #{tpu_custom_call.1} parent=5 // pred_region
        %s467 = ssub.s32 %s13, 2
      $region60: #{tpu_custom_call.1} parent=5 // pred_fallthru
        _
    $region6: #{tpu_custom_call.1} parent=1 // loop_footer
      %s17 = sadd.s32 1, %s13
    $region7: #{tpu_custom_call.1} parent=1 // loop_footer_branch
      %12 = sbr.rel target = $region3
    $region8: #{tpu_custom_call.1} parent=1 // loop_exit
      _
    %468 = vsyncpa [#allocation5], 1
    %s469 = scalar_lea.sflag [#allocation5], 1
    %470 = vsyncpa %s469, 1
    %471 = vsyncpa [#allocation7], 1

</llo_original>
